<compile_context>
chip_gen: v6e
topology: v6e:2x2x1
jax: 0.10.0
libtpu: 0.0.40
codegen_flags: <defaults>
</compile_context>

<pallas_src>
import jax
import jax.numpy as jnp
from jax import lax
from jax.experimental import pallas as pl
from jax.experimental.pallas import tpu as pltpu

DIM = 2                 # RealNVPFlow(dim=2)
HIDDEN = 32             # hidden_dim of the s/t sub-networks (small test size)
H2 = 2 * HIDDEN         # fused s|t hidden width
N_COUPLINGS = 4         # number of coupling layers
BATCH = 16
OUT_LANES = 128         # lane-dense output slab width

# --- packed-parameter slab layout (rows of a (SLAB_ROWS, 128) block) --------
SLAB_LANES = 128
SEC_A = 16                                   # rows 0..D-1: W1, row D: b1, row D+1: b2
ROW_W2 = SEC_A                               # rows [ROW_W2, ROW_W2+H2): block-diag [sW2 0; 0 tW2]
ROW_W3 = ROW_W2 + H2                         # rows [ROW_W3, ROW_W3+H2): (1-m)-folded [sW3 0; 0 tW3]
ROW_B3 = ROW_W3 + H2                         # row ROW_B3: (1-m)-folded b3
SLAB_ROWS = ((ROW_B3 + 1 + 15) // 16) * 16   # 160 — bf16 sublane-tile aligned


# ----------------------------------------------------------------------------
# Kernel
# ----------------------------------------------------------------------------
def realnvp_fused_kernel(x_ref, p_ref, out_ref):
    # x_ref   : (TB, D)              f32 input tile
    # p_ref   : (L, SLAB_ROWS, 128)  bf16 packed per-coupling parameters
    # out_ref : (TB, 128)            f32; lanes [0, D) = z, lane D = logdet
    L = p_ref.shape[0]
    TB = x_ref.shape[0]
    D = x_ref.shape[1]

    z = x_ref[...].astype(jnp.float32)                    # (TB, D)
    logdet = jnp.zeros((TB, 1), jnp.float32)              # (TB, 1)
    ones_col = jnp.ones((TB, 1), jnp.float32)              # hoisted out of loop

    for l in range(L):  # static unroll — L is small
        slab = p_ref[l]                                     # (SLAB_ROWS, 128) bf16
        w1b = slab[0:D + 1, 0:H2]                           # (D+1, 2H)  [mask-folded W1 ; b1]
        b2 = slab[D + 1:D + 2, 0:H2].astype(jnp.float32)    # (1, 2H)
        w2 = slab[ROW_W2:ROW_W2 + H2, 0:H2]                 # (2H, 2H)  block-diag s|t
        w3 = slab[ROW_W3:ROW_W3 + H2, 0:2 * D]              # (2H, 2D)  (1-m)-folded
        b3 = slab[ROW_B3:ROW_B3 + 1, 0:2 * D].astype(jnp.float32)  # (1, 2D)

        # Layer 1 on the MXU: bias folded in via a ones column; bf16 operands,
        # f32 accumulation.
        z_aug = jnp.concatenate([z, ones_col], axis=1).astype(jnp.bfloat16)
        h = jnp.dot(z_aug, w1b, preferred_element_type=jnp.float32)   # (TB, 2H)
        h = jnp.maximum(h, 0.0)

        # Layer 2 (fused block-diag s|t) + layer 3 on the MXU.
        h = jnp.dot(h.astype(jnp.bfloat16), w2,
                    preferred_element_type=jnp.float32) + b2
        h = jnp.maximum(h, 0.0)
        st = jnp.dot(h.astype(jnp.bfloat16), w3,
                     preferred_element_type=jnp.float32) + b3          # (TB, 2D)

        # s/t already carry the (1 - mask) factor (folded into W3/b3).
        s = jnp.clip(st[:, 0:D], -5.0, 5.0)    # clip BEFORE exp (padded rows stay finite)
        t = st[:, D:2 * D]
        logdet = logdet + jnp.sum(s, axis=1, keepdims=True)
        # With masked s, t:  z*exp(s)+t == mask*z + (1-mask)*(z*exp(s)+t).
        z = z * jnp.exp(s) + t
        # Coordinate swap between couplings is folded into the parameters.

    # Lane-dense output slab: [z | logdet | zeros] -> one unmasked 128-lane store.
    pad = jnp.zeros((TB, OUT_LANES - D - 1), jnp.float32)
    out_ref[...] = jnp.concatenate([z, logdet, pad], axis=1)


# ----------------------------------------------------------------------------
# Wrapper
# ----------------------------------------------------------------------------
def _choose_tile_b(B):
    """Sublane-aligned batch tile.

    Small batches: one grid step (purely launch-latency bound anyway).
    Large batches: 512..4096-row tiles, >=8 grid steps for DMA/compute overlap
    and v7x dual-TensorCore sharding of the 'parallel' batch axis; 4096 also
    stays under v5e's default 16 MiB scoped VMEM for the lane-padded input.
    """
    if B <= 512:
        return B
    tile = min(4096, max(512, pl.cdiv(B, 8)))
    tile = ((tile + 7) // 8) * 8            # multiple of 8 (f32 sublane)
    return min(tile, B)


def realnvp_forward(x, params, *, tile_b=None):
    B, D = x.shape
    L = params.shape[0]
    if tile_b is None:
        tile_b = _choose_tile_b(B)
    tile_b = min(tile_b, B)
    grid = (pl.cdiv(B, tile_b),)

    out = pl.pallas_call(
        realnvp_fused_kernel,
        out_shape=jax.ShapeDtypeStruct((B, OUT_LANES), jnp.float32),
        grid=grid,
        in_specs=[pl.BlockSpec((tile_b, D), lambda i: (i, 0)),
                  pl.BlockSpec(params.shape, lambda i: (0, 0, 0))],
        out_specs=pl.BlockSpec((tile_b, OUT_LANES), lambda i: (i, 0)),
        compiler_params=pltpu.CompilerParams(
            dimension_semantics=("parallel",)),
    )(x, params)

    z = out[:, :D]
    logdet = out[:, D]
    if L % 2 == 1:                     # undo the leftover swap (P^L) if L odd
        z = z[:, ::-1]
    return z, logdet


# ----------------------------------------------------------------------------
# Parameter construction (host side)
# ----------------------------------------------------------------------------
def init_raw_params(key, n_couplings=N_COUPLINGS, dim=DIM, hidden=HIDDEN):
    """Raw per-coupling params, torch-Linear-style (W stored as (in, out))."""
    raw = []
    for k in range(n_couplings):
        kk = jax.random.fold_in(key, k)
        kmask, ks, kt = jax.random.split(kk, 3)

        mask = jnp.zeros((dim,), jnp.float32)
        if k % 2 == 0:
            mask = mask.at[:dim // 2].set(1.0)
        else:
            mask = mask.at[dim // 2:].set(1.0)
        # torch flips each mask with prob 0.5 at construction time.
        mask = jnp.where(jax.random.bernoulli(kmask), 1.0 - mask, mask)

        def linear(kl, fan_in, fan_out, scale=1.0):
            kw, kb = jax.random.split(kl)
            bound = scale / jnp.sqrt(jnp.float32(fan_in))
            W = jax.random.uniform(kw, (fan_in, fan_out), jnp.float32, -bound, bound)
            b = jax.random.uniform(kb, (1, fan_out), jnp.float32, -bound, bound)
            return W, b

        def net(kn):
            k1, k2, k3 = jax.random.split(kn, 3)
            W1, b1 = linear(k1, dim, hidden)
            W2, b2 = linear(k2, hidden, hidden)
            # torch zero-inits the last Linear (identity flow); small random
            # values are used instead so the kernel compute is exercised.
            W3, b3 = linear(k3, hidden, dim, scale=0.25)
            return (W1, b1, W2, b2, W3, b3)

        raw.append((mask, net(ks), net(kt)))
    return raw


def pack_params(raw, dim=DIM, hidden=HIDDEN):
    """Fold permutation + masks into the weights, fuse s/t nets, and pack every
    coupling into one lane-dense (SLAB_ROWS, 128) bf16 block."""
    h2 = 2 * hidden
    slabs = []
    for k, (mask, s_net, t_net) in enumerate(raw):
        sW1, sb1, sW2, sb2, sW3, sb3 = s_net
        tW1, tb1, tW2, tb2, tW3, tb3 = t_net
        if k % 2 == 1:
            # Conjugate coupling k by P^k (P = coordinate swap) so the explicit
            # swap between couplings disappears from the kernel.
            mask = mask[::-1]
            sW1, tW1 = sW1[::-1, :], tW1[::-1, :]
            sW3, tW3 = sW3[:, ::-1], tW3[:, ::-1]
            sb3, tb3 = sb3[:, ::-1], tb3[:, ::-1]

        m_col = mask.reshape(dim, 1)                 # fold x*mask into W1 rows
        one_minus_m = (1.0 - mask).reshape(1, dim)

        W1f = jnp.concatenate([sW1, tW1], axis=1) * m_col          # (D, 2H)
        b1f = jnp.concatenate([sb1, tb1], axis=1)                  # (1, 2H)
        b2f = jnp.concatenate([sb2, tb2], axis=1)                  # (1, 2H)

        W2f = jnp.zeros((h2, h2), jnp.float32)
        W2f = W2f.at[:hidden, :hidden].set(sW2).at[hidden:, hidden:].set(tW2)

        W3f = jnp.zeros((h2, 2 * dim), jnp.float32)
        W3f = W3f.at[:hidden, :dim].set(sW3 * one_minus_m)
        W3f = W3f.at[hidden:, dim:].set(tW3 * one_minus_m)
        b3f = jnp.concatenate([sb3 * one_minus_m, tb3 * one_minus_m], axis=1)

        slab = jnp.zeros((SLAB_ROWS, SLAB_LANES), jnp.float32)
        slab = slab.at[0:dim, 0:h2].set(W1f)
        slab = slab.at[dim:dim + 1, 0:h2].set(b1f)
        slab = slab.at[dim + 1:dim + 2, 0:h2].set(b2f)
        slab = slab.at[ROW_W2:ROW_W2 + h2, 0:h2].set(W2f)
        slab = slab.at[ROW_W3:ROW_W3 + h2, 0:2 * dim].set(W3f)
        slab = slab.at[ROW_B3:ROW_B3 + 1, 0:2 * dim].set(b3f)
        slabs.append(slab)
    return jnp.stack(slabs).astype(jnp.bfloat16)     # (L, SLAB_ROWS, 128)


# ----------------------------------------------------------------------------
# Pure-JAX reference: original RealNVPFlow.forward semantics
# ----------------------------------------------------------------------------
def reference_forward(x, raw):
    HI = lax.Precision.HIGHEST
    z = x
    logdet = jnp.zeros((x.shape[0],), jnp.float32)
    for (mask, s_net, t_net) in raw:
        m = mask.reshape(1, -1)
        om = 1.0 - m
        xm = z * m

        def mlp(h, params):
            W1, b1, W2, b2, W3, b3 = params
            h = jax.nn.relu(jnp.dot(h, W1, precision=HI) + b1)
            h = jax.nn.relu(jnp.dot(h, W2, precision=HI) + b2)
            return jnp.dot(h, W3, precision=HI) + b3

        s = jnp.clip(mlp(xm, s_net) * om, -5.0, 5.0)
        t = mlp(xm, t_net) * om
        y = xm + om * (z * jnp.exp(s) + t)
        logdet = logdet + jnp.sum(s * om, axis=1)
        z = jnp.stack([y[:, 1], y[:, 0]], axis=1)    # dim==2 coordinate swap
    return z, logdet


if __name__ == "__main__":
    key = jax.random.PRNGKey(0)
    kx, kp = jax.random.split(key)
    x = jax.random.normal(kx, (BATCH, DIM), jnp.float32)

    raw = init_raw_params(kp)
    params = pack_params(raw)

    z, logdet = realnvp_forward(x, params)
    z = jax.block_until_ready(z)
    logdet = jax.block_until_ready(logdet)

    z_ref, logdet_ref = reference_forward(x, raw)
    assert z.shape == (BATCH, DIM) and logdet.shape == (BATCH,)
    assert jnp.allclose(z, z_ref, rtol=1e-2, atol=1e-2), "z mismatch"
    assert jnp.allclose(logdet, logdet_ref, rtol=1e-2, atol=1e-2), "logdet mismatch"

    print("KERNEL_OK")
</pallas_src>

<mosaic_0001>
module attributes {stable_mosaic.version = 11 : i64} {
  func.func @realnvp_fused_kernel(%arg0: i32, %arg1: memref<16x2xf32, #tpu.memory_space<vmem>>, %arg2: memref<4x160x128xbf16, #tpu.memory_space<vmem>>, %arg3: memref<16x128xf32, #tpu.memory_space<vmem>>) attributes {dimension_semantics = [#tpu.dimension_semantics<parallel>], iteration_bounds = array<i64: 1>, scalar_prefetch = 0 : i64, scratch_operands = 0 : i64, tpu.core_type = #tpu.core_type<tc>, window_params = [{transform_indices = @transform_0, window_bounds = array<i64: 16, 2>}, {pipeline_mode = #tpu.pipeline_mode<synchronous>, transform_indices = @transform_1, window_bounds = array<i64: 4, 160, 128>}, {transform_indices = @transform_2, window_bounds = array<i64: 16, 128>}]} {
    %c0 = arith.constant 0 : index
    %c0_0 = arith.constant 0 : index
    %0 = vector.load %arg1[%c0, %c0_0] : memref<16x2xf32, #tpu.memory_space<vmem>>, vector<16x2xf32>
    %cst = arith.constant 0.000000e+00 : f32
    %1 = vector.broadcast %cst : f32 to vector<16x1xf32>
    %cst_1 = arith.constant 1.000000e+00 : f32
    %2 = vector.broadcast %cst_1 : f32 to vector<16x1xf32>
    %c0_2 = arith.constant 0 : index
    %c0_3 = arith.constant 0 : index
    %c0_4 = arith.constant 0 : index
    %3 = vector.load %arg2[%c0_2, %c0_3, %c0_4] : memref<4x160x128xbf16, #tpu.memory_space<vmem>>, vector<1x160x128xbf16>
    %4 = vector.shape_cast %3 : vector<1x160x128xbf16> to vector<160x128xbf16>
    %5 = vector.extract_strided_slice %4 {offsets = [0, 0], sizes = [3, 64], strides = [1, 1]} : vector<160x128xbf16> to vector<3x64xbf16>
    %6 = vector.extract_strided_slice %4 {offsets = [3, 0], sizes = [1, 64], strides = [1, 1]} : vector<160x128xbf16> to vector<1x64xbf16>
    %7 = arith.extf %6 : vector<1x64xbf16> to vector<1x64xf32>
    %8 = vector.extract_strided_slice %4 {offsets = [16, 0], sizes = [64, 64], strides = [1, 1]} : vector<160x128xbf16> to vector<64x64xbf16>
    %9 = vector.extract_strided_slice %4 {offsets = [80, 0], sizes = [64, 4], strides = [1, 1]} : vector<160x128xbf16> to vector<64x4xbf16>
    %10 = vector.extract_strided_slice %4 {offsets = [144, 0], sizes = [1, 4], strides = [1, 1]} : vector<160x128xbf16> to vector<1x4xbf16>
    %11 = arith.extf %10 : vector<1x4xbf16> to vector<1x4xf32>
    %12 = tpu.concatenate %0, %2 in 1 : vector<16x2xf32>, vector<16x1xf32> -> vector<16x3xf32>
    %13 = arith.truncf %12 : vector<16x3xf32> to vector<16x3xbf16>
    %cst_5 = arith.constant dense<0.000000e+00> : vector<16x64xf32>
    %14 = tpu.matmul %13, %5, %cst_5 {dimension_numbers = #tpu.dot_dimension_numbers<[1], [0], [0], [1], [0, 0, 1, 1], [], []>} : vector<16x3xbf16>, vector<3x64xbf16>, vector<16x64xf32> -> vector<16x64xf32>
    %cst_6 = arith.constant 0.000000e+00 : f32
    %15 = vector.broadcast %cst_6 : f32 to vector<16x64xf32>
    %16 = arith.maximumf %14, %15 : vector<16x64xf32>
    %17 = arith.truncf %16 : vector<16x64xf32> to vector<16x64xbf16>
    %cst_7 = arith.constant dense<0.000000e+00> : vector<16x64xf32>
    %18 = tpu.matmul %17, %8, %cst_7 {dimension_numbers = #tpu.dot_dimension_numbers<[1], [0], [0], [1], [0, 0, 1, 1], [], []>} : vector<16x64xbf16>, vector<64x64xbf16>, vector<16x64xf32> -> vector<16x64xf32>
    %19 = vector.broadcast %7 : vector<1x64xf32> to vector<16x64xf32>
    %20 = arith.addf %18, %19 : vector<16x64xf32>
    %cst_8 = arith.constant 0.000000e+00 : f32
    %21 = vector.broadcast %cst_8 : f32 to vector<16x64xf32>
    %22 = arith.maximumf %20, %21 : vector<16x64xf32>
    %23 = arith.truncf %22 : vector<16x64xf32> to vector<16x64xbf16>
    %cst_9 = arith.constant dense<0.000000e+00> : vector<16x4xf32>
    %24 = tpu.matmul %23, %9, %cst_9 {dimension_numbers = #tpu.dot_dimension_numbers<[1], [0], [0], [1], [0, 0, 1, 1], [], []>} : vector<16x64xbf16>, vector<64x4xbf16>, vector<16x4xf32> -> vector<16x4xf32>
    %25 = vector.broadcast %11 : vector<1x4xf32> to vector<16x4xf32>
    %26 = arith.addf %24, %25 : vector<16x4xf32>
    %27 = vector.extract_strided_slice %26 {offsets = [0, 0], sizes = [16, 2], strides = [1, 1]} : vector<16x4xf32> to vector<16x2xf32>
    %cst_10 = arith.constant -5.000000e+00 : f32
    %cst_11 = arith.constant 5.000000e+00 : f32
    %28 = vector.broadcast %cst_10 : f32 to vector<16x2xf32>
    %29 = arith.maximumf %28, %27 : vector<16x2xf32>
    %30 = vector.broadcast %cst_11 : f32 to vector<16x2xf32>
    %31 = arith.minimumf %30, %29 : vector<16x2xf32>
    %32 = vector.extract_strided_slice %26 {offsets = [0, 2], sizes = [16, 2], strides = [1, 1]} : vector<16x4xf32> to vector<16x2xf32>
    %cst_12 = arith.constant dense<0.000000e+00> : vector<16xf32>
    %33 = vector.multi_reduction <add>, %31, %cst_12 [1] : vector<16x2xf32> to vector<16xf32>
    %34 = vector.shape_cast %33 : vector<16xf32> to vector<16x1xf32>
    %35 = arith.addf %1, %34 : vector<16x1xf32>
    %36 = math.exp %31 : vector<16x2xf32>
    %37 = arith.mulf %0, %36 : vector<16x2xf32>
    %38 = arith.addf %37, %32 : vector<16x2xf32>
    %c1 = arith.constant 1 : index
    %c0_13 = arith.constant 0 : index
    %c0_14 = arith.constant 0 : index
    %39 = vector.load %arg2[%c1, %c0_13, %c0_14] : memref<4x160x128xbf16, #tpu.memory_space<vmem>>, vector<1x160x128xbf16>
    %40 = vector.shape_cast %39 : vector<1x160x128xbf16> to vector<160x128xbf16>
    %41 = vector.extract_strided_slice %40 {offsets = [0, 0], sizes = [3, 64], strides = [1, 1]} : vector<160x128xbf16> to vector<3x64xbf16>
    %42 = vector.extract_strided_slice %40 {offsets = [3, 0], sizes = [1, 64], strides = [1, 1]} : vector<160x128xbf16> to vector<1x64xbf16>
    %43 = arith.extf %42 : vector<1x64xbf16> to vector<1x64xf32>
    %44 = vector.extract_strided_slice %40 {offsets = [16, 0], sizes = [64, 64], strides = [1, 1]} : vector<160x128xbf16> to vector<64x64xbf16>
    %45 = vector.extract_strided_slice %40 {offsets = [80, 0], sizes = [64, 4], strides = [1, 1]} : vector<160x128xbf16> to vector<64x4xbf16>
    %46 = vector.extract_strided_slice %40 {offsets = [144, 0], sizes = [1, 4], strides = [1, 1]} : vector<160x128xbf16> to vector<1x4xbf16>
    %47 = arith.extf %46 : vector<1x4xbf16> to vector<1x4xf32>
    %48 = tpu.concatenate %38, %2 in 1 : vector<16x2xf32>, vector<16x1xf32> -> vector<16x3xf32>
    %49 = arith.truncf %48 : vector<16x3xf32> to vector<16x3xbf16>
    %cst_15 = arith.constant dense<0.000000e+00> : vector<16x64xf32>
    %50 = tpu.matmul %49, %41, %cst_15 {dimension_numbers = #tpu.dot_dimension_numbers<[1], [0], [0], [1], [0, 0, 1, 1], [], []>} : vector<16x3xbf16>, vector<3x64xbf16>, vector<16x64xf32> -> vector<16x64xf32>
    %cst_16 = arith.constant 0.000000e+00 : f32
    %51 = vector.broadcast %cst_16 : f32 to vector<16x64xf32>
    %52 = arith.maximumf %50, %51 : vector<16x64xf32>
    %53 = arith.truncf %52 : vector<16x64xf32> to vector<16x64xbf16>
    %cst_17 = arith.constant dense<0.000000e+00> : vector<16x64xf32>
    %54 = tpu.matmul %53, %44, %cst_17 {dimension_numbers = #tpu.dot_dimension_numbers<[1], [0], [0], [1], [0, 0, 1, 1], [], []>} : vector<16x64xbf16>, vector<64x64xbf16>, vector<16x64xf32> -> vector<16x64xf32>
    %55 = vector.broadcast %43 : vector<1x64xf32> to vector<16x64xf32>
    %56 = arith.addf %54, %55 : vector<16x64xf32>
    %cst_18 = arith.constant 0.000000e+00 : f32
    %57 = vector.broadcast %cst_18 : f32 to vector<16x64xf32>
    %58 = arith.maximumf %56, %57 : vector<16x64xf32>
    %59 = arith.truncf %58 : vector<16x64xf32> to vector<16x64xbf16>
    %cst_19 = arith.constant dense<0.000000e+00> : vector<16x4xf32>
    %60 = tpu.matmul %59, %45, %cst_19 {dimension_numbers = #tpu.dot_dimension_numbers<[1], [0], [0], [1], [0, 0, 1, 1], [], []>} : vector<16x64xbf16>, vector<64x4xbf16>, vector<16x4xf32> -> vector<16x4xf32>
    %61 = vector.broadcast %47 : vector<1x4xf32> to vector<16x4xf32>
    %62 = arith.addf %60, %61 : vector<16x4xf32>
    %63 = vector.extract_strided_slice %62 {offsets = [0, 0], sizes = [16, 2], strides = [1, 1]} : vector<16x4xf32> to vector<16x2xf32>
    %cst_20 = arith.constant -5.000000e+00 : f32
    %cst_21 = arith.constant 5.000000e+00 : f32
    %64 = vector.broadcast %cst_20 : f32 to vector<16x2xf32>
    %65 = arith.maximumf %64, %63 : vector<16x2xf32>
    %66 = vector.broadcast %cst_21 : f32 to vector<16x2xf32>
    %67 = arith.minimumf %66, %65 : vector<16x2xf32>
    %68 = vector.extract_strided_slice %62 {offsets = [0, 2], sizes = [16, 2], strides = [1, 1]} : vector<16x4xf32> to vector<16x2xf32>
    %cst_22 = arith.constant dense<0.000000e+00> : vector<16xf32>
    %69 = vector.multi_reduction <add>, %67, %cst_22 [1] : vector<16x2xf32> to vector<16xf32>
    %70 = vector.shape_cast %69 : vector<16xf32> to vector<16x1xf32>
    %71 = arith.addf %35, %70 : vector<16x1xf32>
    %72 = math.exp %67 : vector<16x2xf32>
    %73 = arith.mulf %38, %72 : vector<16x2xf32>
    %74 = arith.addf %73, %68 : vector<16x2xf32>
    %c2 = arith.constant 2 : index
    %c0_23 = arith.constant 0 : index
    %c0_24 = arith.constant 0 : index
    %75 = vector.load %arg2[%c2, %c0_23, %c0_24] : memref<4x160x128xbf16, #tpu.memory_space<vmem>>, vector<1x160x128xbf16>
    %76 = vector.shape_cast %75 : vector<1x160x128xbf16> to vector<160x128xbf16>
    %77 = vector.extract_strided_slice %76 {offsets = [0, 0], sizes = [3, 64], strides = [1, 1]} : vector<160x128xbf16> to vector<3x64xbf16>
    %78 = vector.extract_strided_slice %76 {offsets = [3, 0], sizes = [1, 64], strides = [1, 1]} : vector<160x128xbf16> to vector<1x64xbf16>
    %79 = arith.extf %78 : vector<1x64xbf16> to vector<1x64xf32>
    %80 = vector.extract_strided_slice %76 {offsets = [16, 0], sizes = [64, 64], strides = [1, 1]} : vector<160x128xbf16> to vector<64x64xbf16>
    %81 = vector.extract_strided_slice %76 {offsets = [80, 0], sizes = [64, 4], strides = [1, 1]} : vector<160x128xbf16> to vector<64x4xbf16>
    %82 = vector.extract_strided_slice %76 {offsets = [144, 0], sizes = [1, 4], strides = [1, 1]} : vector<160x128xbf16> to vector<1x4xbf16>
    %83 = arith.extf %82 : vector<1x4xbf16> to vector<1x4xf32>
    %84 = tpu.concatenate %74, %2 in 1 : vector<16x2xf32>, vector<16x1xf32> -> vector<16x3xf32>
    %85 = arith.truncf %84 : vector<16x3xf32> to vector<16x3xbf16>
    %cst_25 = arith.constant dense<0.000000e+00> : vector<16x64xf32>
    %86 = tpu.matmul %85, %77, %cst_25 {dimension_numbers = #tpu.dot_dimension_numbers<[1], [0], [0], [1], [0, 0, 1, 1], [], []>} : vector<16x3xbf16>, vector<3x64xbf16>, vector<16x64xf32> -> vector<16x64xf32>
    %cst_26 = arith.constant 0.000000e+00 : f32
    %87 = vector.broadcast %cst_26 : f32 to vector<16x64xf32>
    %88 = arith.maximumf %86, %87 : vector<16x64xf32>
    %89 = arith.truncf %88 : vector<16x64xf32> to vector<16x64xbf16>
    %cst_27 = arith.constant dense<0.000000e+00> : vector<16x64xf32>
    %90 = tpu.matmul %89, %80, %cst_27 {dimension_numbers = #tpu.dot_dimension_numbers<[1], [0], [0], [1], [0, 0, 1, 1], [], []>} : vector<16x64xbf16>, vector<64x64xbf16>, vector<16x64xf32> -> vector<16x64xf32>
    %91 = vector.broadcast %79 : vector<1x64xf32> to vector<16x64xf32>
    %92 = arith.addf %90, %91 : vector<16x64xf32>
    %cst_28 = arith.constant 0.000000e+00 : f32
    %93 = vector.broadcast %cst_28 : f32 to vector<16x64xf32>
    %94 = arith.maximumf %92, %93 : vector<16x64xf32>
    %95 = arith.truncf %94 : vector<16x64xf32> to vector<16x64xbf16>
    %cst_29 = arith.constant dense<0.000000e+00> : vector<16x4xf32>
    %96 = tpu.matmul %95, %81, %cst_29 {dimension_numbers = #tpu.dot_dimension_numbers<[1], [0], [0], [1], [0, 0, 1, 1], [], []>} : vector<16x64xbf16>, vector<64x4xbf16>, vector<16x4xf32> -> vector<16x4xf32>
    %97 = vector.broadcast %83 : vector<1x4xf32> to vector<16x4xf32>
    %98 = arith.addf %96, %97 : vector<16x4xf32>
    %99 = vector.extract_strided_slice %98 {offsets = [0, 0], sizes = [16, 2], strides = [1, 1]} : vector<16x4xf32> to vector<16x2xf32>
    %cst_30 = arith.constant -5.000000e+00 : f32
    %cst_31 = arith.constant 5.000000e+00 : f32
    %100 = vector.broadcast %cst_30 : f32 to vector<16x2xf32>
    %101 = arith.maximumf %100, %99 : vector<16x2xf32>
    %102 = vector.broadcast %cst_31 : f32 to vector<16x2xf32>
    %103 = arith.minimumf %102, %101 : vector<16x2xf32>
    %104 = vector.extract_strided_slice %98 {offsets = [0, 2], sizes = [16, 2], strides = [1, 1]} : vector<16x4xf32> to vector<16x2xf32>
    %cst_32 = arith.constant dense<0.000000e+00> : vector<16xf32>
    %105 = vector.multi_reduction <add>, %103, %cst_32 [1] : vector<16x2xf32> to vector<16xf32>
    %106 = vector.shape_cast %105 : vector<16xf32> to vector<16x1xf32>
    %107 = arith.addf %71, %106 : vector<16x1xf32>
    %108 = math.exp %103 : vector<16x2xf32>
    %109 = arith.mulf %74, %108 : vector<16x2xf32>
    %110 = arith.addf %109, %104 : vector<16x2xf32>
    %c3 = arith.constant 3 : index
    %c0_33 = arith.constant 0 : index
    %c0_34 = arith.constant 0 : index
    %111 = vector.load %arg2[%c3, %c0_33, %c0_34] : memref<4x160x128xbf16, #tpu.memory_space<vmem>>, vector<1x160x128xbf16>
    %112 = vector.shape_cast %111 : vector<1x160x128xbf16> to vector<160x128xbf16>
    %113 = vector.extract_strided_slice %112 {offsets = [0, 0], sizes = [3, 64], strides = [1, 1]} : vector<160x128xbf16> to vector<3x64xbf16>
    %114 = vector.extract_strided_slice %112 {offsets = [3, 0], sizes = [1, 64], strides = [1, 1]} : vector<160x128xbf16> to vector<1x64xbf16>
    %115 = arith.extf %114 : vector<1x64xbf16> to vector<1x64xf32>
    %116 = vector.extract_strided_slice %112 {offsets = [16, 0], sizes = [64, 64], strides = [1, 1]} : vector<160x128xbf16> to vector<64x64xbf16>
    %117 = vector.extract_strided_slice %112 {offsets = [80, 0], sizes = [64, 4], strides = [1, 1]} : vector<160x128xbf16> to vector<64x4xbf16>
    %118 = vector.extract_strided_slice %112 {offsets = [144, 0], sizes = [1, 4], strides = [1, 1]} : vector<160x128xbf16> to vector<1x4xbf16>
    %119 = arith.extf %118 : vector<1x4xbf16> to vector<1x4xf32>
    %120 = tpu.concatenate %110, %2 in 1 : vector<16x2xf32>, vector<16x1xf32> -> vector<16x3xf32>
    %121 = arith.truncf %120 : vector<16x3xf32> to vector<16x3xbf16>
    %cst_35 = arith.constant dense<0.000000e+00> : vector<16x64xf32>
    %122 = tpu.matmul %121, %113, %cst_35 {dimension_numbers = #tpu.dot_dimension_numbers<[1], [0], [0], [1], [0, 0, 1, 1], [], []>} : vector<16x3xbf16>, vector<3x64xbf16>, vector<16x64xf32> -> vector<16x64xf32>
    %cst_36 = arith.constant 0.000000e+00 : f32
    %123 = vector.broadcast %cst_36 : f32 to vector<16x64xf32>
    %124 = arith.maximumf %122, %123 : vector<16x64xf32>
    %125 = arith.truncf %124 : vector<16x64xf32> to vector<16x64xbf16>
    %cst_37 = arith.constant dense<0.000000e+00> : vector<16x64xf32>
    %126 = tpu.matmul %125, %116, %cst_37 {dimension_numbers = #tpu.dot_dimension_numbers<[1], [0], [0], [1], [0, 0, 1, 1], [], []>} : vector<16x64xbf16>, vector<64x64xbf16>, vector<16x64xf32> -> vector<16x64xf32>
    %127 = vector.broadcast %115 : vector<1x64xf32> to vector<16x64xf32>
    %128 = arith.addf %126, %127 : vector<16x64xf32>
    %cst_38 = arith.constant 0.000000e+00 : f32
    %129 = vector.broadcast %cst_38 : f32 to vector<16x64xf32>
    %130 = arith.maximumf %128, %129 : vector<16x64xf32>
    %131 = arith.truncf %130 : vector<16x64xf32> to vector<16x64xbf16>
    %cst_39 = arith.constant dense<0.000000e+00> : vector<16x4xf32>
    %132 = tpu.matmul %131, %117, %cst_39 {dimension_numbers = #tpu.dot_dimension_numbers<[1], [0], [0], [1], [0, 0, 1, 1], [], []>} : vector<16x64xbf16>, vector<64x4xbf16>, vector<16x4xf32> -> vector<16x4xf32>
    %133 = vector.broadcast %119 : vector<1x4xf32> to vector<16x4xf32>
    %134 = arith.addf %132, %133 : vector<16x4xf32>
    %135 = vector.extract_strided_slice %134 {offsets = [0, 0], sizes = [16, 2], strides = [1, 1]} : vector<16x4xf32> to vector<16x2xf32>
    %cst_40 = arith.constant -5.000000e+00 : f32
    %cst_41 = arith.constant 5.000000e+00 : f32
    %136 = vector.broadcast %cst_40 : f32 to vector<16x2xf32>
    %137 = arith.maximumf %136, %135 : vector<16x2xf32>
    %138 = vector.broadcast %cst_41 : f32 to vector<16x2xf32>
    %139 = arith.minimumf %138, %137 : vector<16x2xf32>
    %140 = vector.extract_strided_slice %134 {offsets = [0, 2], sizes = [16, 2], strides = [1, 1]} : vector<16x4xf32> to vector<16x2xf32>
    %cst_42 = arith.constant dense<0.000000e+00> : vector<16xf32>
    %141 = vector.multi_reduction <add>, %139, %cst_42 [1] : vector<16x2xf32> to vector<16xf32>
    %142 = vector.shape_cast %141 : vector<16xf32> to vector<16x1xf32>
    %143 = arith.addf %107, %142 : vector<16x1xf32>
    %144 = math.exp %139 : vector<16x2xf32>
    %145 = arith.mulf %110, %144 : vector<16x2xf32>
    %146 = arith.addf %145, %140 : vector<16x2xf32>
    %cst_43 = arith.constant 0.000000e+00 : f32
    %147 = vector.broadcast %cst_43 : f32 to vector<16x125xf32>
    %148 = tpu.concatenate %146, %143, %147 in 1 : vector<16x2xf32>, vector<16x1xf32>, vector<16x125xf32> -> vector<16x128xf32>
    %c0_44 = arith.constant 0 : index
    %c0_45 = arith.constant 0 : index
    %149 = vector.load %arg3[%c0_44, %c0_45] : memref<16x128xf32, #tpu.memory_space<vmem>>, vector<16x128xf32>
    tpu.vector_store %arg3[%c0_44, %c0_45], %148 {strides = array<i32>} : memref<16x128xf32, #tpu.memory_space<vmem>>, vector<16x128xf32>,
    return
  }
  func.func @transform_0(%arg0: i32) -> (i32, i32) {
    %c0_i32 = arith.constant 0 : i32
    %c0_i32_0 = arith.constant 0 : i32
    return %arg0, %c0_i32 : i32, i32
  }
  func.func @transform_1(%arg0: i32) -> (i32, i32, i32) {
    %c0_i32 = arith.constant 0 : i32
    %c0_i32_0 = arith.constant 0 : i32
    %c0_i32_1 = arith.constant 0 : i32
    %c0_i32_2 = arith.constant 0 : i32
    return %c0_i32, %c0_i32_0, %c0_i32_1 : i32, i32, i32
  }
  func.func @transform_2(%arg0: i32) -> (i32, i32) {
    %c0_i32 = arith.constant 0 : i32
    %c0_i32_0 = arith.constant 0 : i32
    return %arg0, %c0_i32 : i32, i32
  }
}

</mosaic_0001>

<llo_original>
// kernel: tpu_custom_call.1
$region0: #{tpu_custom_call.1}
  #allocation0 [shape = 'u32[]', space=smem, size = 0x4, offset = 0x4, fixed_abs, tag = 'smem constant byte address 0x4 - core index']
  #allocation1 [shape = 'u32[144,128]{1,0:T(1,128)}', space=vmem, size = 0x12000, scoped, tag = 'internal scratch']
  %s0 = inlined_call_operand.vmem [shape: f32[16,2], index: 0, kind: input, shape index: {}]
  %s1 = inlined_call_operand.hbm [shape: bf16[4,160,128], index: 1, kind: input, shape index: {}]
  %s2 = inlined_call_operand.hbm [shape: f32[16,128], index: 2, kind: output, shape index: {}]
  %s3 = sld [smem:[#allocation0]]
  $region22: #{tpu_custom_call.1} parent=0
    _
  %s5 = ssub.s32 1, %s3
  %s6 = scalar_select 0, %s5, %s3
  $region1: #{tpu_custom_call.1} parent=0
    #allocation2 [shape = 'u8[163840]{0}', space=vmem, size = 0x28000, scoped, tag = 'input window, operand 1, single buffered']
    #allocation3 [shape = 's32[1]{0}', space=sflag, size = 0x4, scoped, tag = 'scoped memory for tpu_custom_call.1']
    #allocation4 [shape = 's32[1]{0}', space=sflag, size = 0x4, scoped, tag = 'scoped memory for tpu_custom_call.1']
    #allocation5 [shape = 'u8[8192]{0}', space=vmem, size = 0x2000, scoped, tag = 'output window, operand 0, single buffered']
    %7 = vsyncpa [#allocation3], 0
    %8 = vsyncpa [#allocation4], 0
    // Predicated region
    $region2: #{tpu_custom_call.1} parent=1 // pred_check
      _
    $region3: #{tpu_custom_call.1} parent=1 // pred_check_branch
      %10 = sbr.rel (0) target = $region5
    $region4: #{tpu_custom_call.1} parent=1 // pred_region
      _
    $region5: #{tpu_custom_call.1} parent=1 // pred_fallthru
      _
    // Predicated region
    $region6: #{tpu_custom_call.1} parent=1 // pred_check
      _
    $region7: #{tpu_custom_call.1} parent=1 // pred_check_branch
      %12 = sbr.rel (0) target = $region9
    $region8: #{tpu_custom_call.1} parent=1 // pred_region
      %s14 = ssub.s32 5120, 5120
      %15 = vsyncadd [#allocation3], %s14
      %s16 = sshll.u32 [#allocation2], 4
      %s17 = int_to_ptr.vmem [resolvable:$true] %s16
      %22 = dma.hbm_to_vmem [thread:$0]  %s1, 5120, %s17, [#allocation3], 64, 64, 4
    $region9: #{tpu_custom_call.1} parent=1 // pred_fallthru
      _
    // Predicated region
    $region10: #{tpu_custom_call.1} parent=1 // pred_check
      _
    $region11: #{tpu_custom_call.1} parent=1 // pred_check_branch
      %24 = sbr.rel (0) target = $region13
    $region12: #{tpu_custom_call.1} parent=1 // pred_region
      %25 = dma.done [#allocation3], 5120
    $region13: #{tpu_custom_call.1} parent=1 // pred_fallthru
      _
    %v27 = vld [vmem:[%s0] sm:$0xff]
    %v28 = vld [vmem:[%s0 + $0x8] sm:$0xff]
    %v29 = vld [vmem:[#allocation2] sm:$0xf]
    %v30 = vld [vmem:[#allocation2 + $0x8] sm:$0xf]
    %v31 = vld [vmem:[#allocation2 + $0xc] sm:$0xf]
    %v32 = vld [vmem:[#allocation2 + $0x10] sm:$0xf]
    %v33 = vld [vmem:[#allocation2 + $0x14] sm:$0xf]
    %v34 = vld [vmem:[#allocation2 + $0x18] sm:$0xf]
    %v35 = vld [vmem:[#allocation2 + $0x1c] sm:$0xf]
    %v36 = vld [vmem:[#allocation2 + $0x20] sm:$0xf]
    %v37 = vld [vmem:[#allocation2 + $0x24] sm:$0xf]
    %v38 = vld [vmem:[#allocation2 + $0x28] sm:$0xf]
    %v39 = vld [vmem:[#allocation2 + $0x2c] sm:$0xf]
    %v40 = vld [vmem:[#allocation2 + $0x30] sm:$0xf]
    %v41 = vld [vmem:[#allocation2 + $0x34] sm:$0xf]
    %v42 = vld [vmem:[#allocation2 + $0x38] sm:$0xf]
    %v43 = vld [vmem:[#allocation2 + $0x3c] sm:$0xf]
    %v44 = vld [vmem:[#allocation2 + $0x40] sm:$0xf]
    %v45 = vld [vmem:[#allocation2 + $0x44] sm:$0xf]
    %v46 = vld [vmem:[#allocation2 + $0x48] sm:$0xf]
    %v47 = vunpack.c.l.bf16 %v29
    %v48 = vunpack.c.l.bf16 %v46
    %vm49 = vcmask 15360
    %v50 = vsel %vm49, %v27, 1.0
    %v51 = vsel %vm49, %v28, 1.0
    %v52 = vpack.c.bf16 %v51, %v50
    %vm53 = vcmask 23552
    %v55 = vsel %vm53, %v52, 0
    %vm57 = vcmask 1040384
    %vm58 = vcmask 1041408
    %v59 = vsel %vm57, 4294967295, 65535
    %v60 = vsel %vm58, %v59, 0
    %v62 = vand.u32 %v29, %v60
    %64 = vmatprep.subr.bf16.mxu0 0
    %65 = vmatpush1.bf16.msra.mxu0 0
    %66 = vmatprep.subr.bf16.mxu0 0
    %67 = vmatpush1.bf16.msra.mxu0 0
    %68 = vmatprep.subr.bf16.mxu0 0
    %69 = vmatpush1.bf16.msra.mxu0 0
    %70 = vmatprep.subr.bf16.mxu0 0
    %71 = vmatpush1.bf16.msra.mxu0 0
    %72 = vmatprep.subr.bf16.mxu0 0
    %73 = vmatpush1.bf16.msra.mxu0 0
    %74 = vmatprep.subr.bf16.mxu0 0
    %75 = vmatpush1.bf16.msra.mxu0 0
    %76 = vmatprep.subr.bf16.mxu0 0
    %77 = vmatpush1.bf16.msra.mxu0 0
    %78 = vmatprep.subr.bf16.mxu0 0
    %79 = vmatpush1.bf16.msra.mxu0 %v62
    %80 = vmatprep.subr.bf16.mxu0 0
    %81 = vmatpush2.bf16.msra.mxu0 0
    %82 = vmatprep.subr.bf16.mxu0 0
    %83 = vmatpush2.bf16.msra.mxu0 0
    %84 = vmatprep.subr.bf16.mxu0 0
    %85 = vmatpush2.bf16.msra.mxu0 0
    %86 = vmatprep.subr.bf16.mxu0 0
    %87 = vmatpush2.bf16.msra.mxu0 0
    %88 = vmatprep.subr.bf16.mxu0 0
    %89 = vmatpush2.bf16.msra.mxu0 0
    %90 = vmatprep.subr.bf16.mxu0 0
    %91 = vmatpush2.bf16.msra.mxu0 0
    %92 = vmatprep.subr.bf16.mxu0 0
    %93 = vmatpush2.bf16.msra.mxu0 0
    %94 = vmatprep.subr.bf16.mxu0 0
    %95 = vmatpush2.bf16.msra.mxu0 0
    %96 = vmatprep.mubr.bf16.mxu0 0
    %97 = vmatmul.mubr.bf16.gmra.mxu0 %v55
    %v98 = vpop.f32.mrf.mxu0
    %v99 = vadd.f32 0.0, %v98
    %v100 = vpop.f32.mrf.mxu0
    %v101 = vpop.f32.mrf.mxu0
    %v102 = vadd.f32 0.0, %v101
    %v103 = vpop.f32.mrf.mxu0
    %104 = vdwg.mxu0
    %v105 = vmax.f32 %v99, 0.0
    %v106 = vmax.f32 %v102, 0.0
    %v107 = vpack.c.bf16 %v106, %v105
    %v108 = vlaneseq
    %v109 = vshrl.u32 %v108, 7
    %v110 = vsub.s32 3, %v109
    %v111 = vrot.slane %v47, %v110
    %v120 = vunpack.c.l.b16 %v30
    %v121 = vunpack.c.l.b16 %v31
    %v122 = vunpack.c.l.b16 %v32
    %v123 = vunpack.c.l.b16 %v33
    %v124 = vunpack.c.l.b16 %v34
    %v125 = vunpack.c.l.b16 %v35
    %v126 = vunpack.c.l.b16 %v36
    %v127 = vunpack.c.l.b16 %v37
    %v128 = vpack.c.b16 %v121, %v120
    %v129 = vpack.c.b16 %v123, %v122
    %v130 = vpack.c.b16 %v125, %v124
    %v131 = vpack.c.b16 %v127, %v126
    %vm136 = vcmask 523264
    %v138 = vsel %vm136, %v107, 0
    %140 = vmatprep.subr.bf16.mxu0 0
    %141 = vmatpush1.bf16.msra.mxu0 0
    %142 = vmatprep.subr.bf16.mxu0 0
    %143 = vmatpush1.bf16.msra.mxu0 0
    %144 = vmatprep.subr.bf16.mxu0 0
    %145 = vmatpush1.bf16.msra.mxu0 0
    %146 = vmatprep.subr.bf16.mxu0 0
    %147 = vmatpush1.bf16.msra.mxu0 0
    %148 = vmatprep.subr.bf16.mxu0 0
    %149 = vmatpush1.bf16.msra.mxu0 %v131
    %150 = vmatprep.subr.bf16.mxu0 0
    %151 = vmatpush1.bf16.msra.mxu0 %v130
    %152 = vmatprep.subr.bf16.mxu0 0
    %153 = vmatpush1.bf16.msra.mxu0 %v129
    %154 = vmatprep.subr.bf16.mxu0 0
    %155 = vmatpush1.bf16.msra.mxu0 %v128
    %156 = vmatprep.subr.bf16.mxu0 0
    %157 = vmatpush2.bf16.msra.mxu0 0
    %158 = vmatprep.subr.bf16.mxu0 0
    %159 = vmatpush2.bf16.msra.mxu0 0
    %160 = vmatprep.subr.bf16.mxu0 0
    %161 = vmatpush2.bf16.msra.mxu0 0
    %162 = vmatprep.subr.bf16.mxu0 0
    %163 = vmatpush2.bf16.msra.mxu0 0
    %164 = vmatprep.subr.bf16.mxu0 0
    %165 = vmatpush2.bf16.msra.mxu0 0
    %166 = vmatprep.subr.bf16.mxu0 0
    %167 = vmatpush2.bf16.msra.mxu0 0
    %168 = vmatprep.subr.bf16.mxu0 0
    %169 = vmatpush2.bf16.msra.mxu0 0
    %170 = vmatprep.subr.bf16.mxu0 0
    %171 = vmatpush2.bf16.msra.mxu0 0
    %172 = vmatprep.mubr.bf16.mxu0 0
    %173 = vmatmul.mubr.bf16.gmra.mxu0 %v138
    %v174 = vpop.f32.mrf.mxu0
    %v175 = vadd.f32 %v111, %v174
    %v176 = vpop.f32.mrf.mxu0
    %v177 = vpop.f32.mrf.mxu0
    %v178 = vadd.f32 %v111, %v177
    %v179 = vpop.f32.mrf.mxu0
    %180 = vdwg.mxu0
    %v181 = vmax.f32 %v175, 0.0
    %v182 = vmax.f32 %v178, 0.0
    %v183 = vpack.c.bf16 %v182, %v181
    %v184 = vlaneseq
    %v185 = vshrl.u32 %v184, 7
    %v186 = vsub.s32 0, %v185
    %v187 = vrot.slane %v48, %v186
    %v196 = vunpack.c.l.b16 %v38
    %v197 = vunpack.c.l.b16 %v39
    %v198 = vunpack.c.l.b16 %v40
    %v199 = vunpack.c.l.b16 %v41
    %v200 = vunpack.c.l.b16 %v42
    %v201 = vunpack.c.l.b16 %v43
    %v202 = vunpack.c.l.b16 %v44
    %v203 = vunpack.c.l.b16 %v45
    %v204 = vpack.c.b16 %v197, %v196
    %v205 = vpack.c.b16 %v199, %v198
    %v206 = vpack.c.b16 %v201, %v200
    %v207 = vpack.c.b16 %v203, %v202
    %v213 = vsel %vm136, %v183, 0
    %215 = vmatprep.subr.bf16.mxu0 0
    %216 = vmatpush1.bf16.msra.mxu0 0
    %217 = vmatprep.subr.bf16.mxu0 0
    %218 = vmatpush1.bf16.msra.mxu0 0
    %219 = vmatprep.subr.bf16.mxu0 0
    %220 = vmatpush1.bf16.msra.mxu0 0
    %221 = vmatprep.subr.bf16.mxu0 0
    %222 = vmatpush1.bf16.msra.mxu0 0
    %223 = vmatprep.subr.bf16.mxu0 0
    %224 = vmatpush1.bf16.msra.mxu0 %v207
    %225 = vmatprep.subr.bf16.mxu0 0
    %226 = vmatpush1.bf16.msra.mxu0 %v206
    %227 = vmatprep.subr.bf16.mxu0 0
    %228 = vmatpush1.bf16.msra.mxu0 %v205
    %229 = vmatprep.subr.bf16.mxu0 0
    %230 = vmatpush1.bf16.msra.mxu0 %v204
    %231 = vmatprep.subr.bf16.mxu0 0
    %232 = vmatpush2.bf16.msra.mxu0 0
    %233 = vmatprep.subr.bf16.mxu0 0
    %234 = vmatpush2.bf16.msra.mxu0 0
    %235 = vmatprep.subr.bf16.mxu0 0
    %236 = vmatpush2.bf16.msra.mxu0 0
    %237 = vmatprep.subr.bf16.mxu0 0
    %238 = vmatpush2.bf16.msra.mxu0 0
    %239 = vmatprep.subr.bf16.mxu0 0
    %240 = vmatpush2.bf16.msra.mxu0 0
    %241 = vmatprep.subr.bf16.mxu0 0
    %242 = vmatpush2.bf16.msra.mxu0 0
    %243 = vmatprep.subr.bf16.mxu0 0
    %244 = vmatpush2.bf16.msra.mxu0 0
    %245 = vmatprep.subr.bf16.mxu0 0
    %246 = vmatpush2.bf16.msra.mxu0 0
    %247 = vmatprep.mubr.bf16.mxu0 0
    %248 = vmatmul.mubr.bf16.gmra.mxu0 %v213
    %v249 = vpop.f32.mrf.mxu0
    %v250 = vadd.f32 %v187, %v249
    %v251 = vpop.f32.mrf.mxu0
    %v252 = vpop.f32.mrf.mxu0
    %v253 = vadd.f32 %v187, %v252
    %v254 = vpop.f32.mrf.mxu0
    %255 = vdwg.mxu0
    %v256 = vmax.f32 %v250, -5.0
    %v257 = vmax.f32 %v253, -5.0
    %v258 = vmin.f32 %v256, 5.0
    %v259 = vmin.f32 %v257, 5.0
    %v260 = vsel %vm49, %v258, 0.0
    %261 = vadd.xlane.f32.xlu0 %v260
    %v262 = vpop.xlane.xlu0 %261
    %v263 = vsel %vm49, %v259, 0.0
    %264 = vadd.xlane.f32.xlu0 %v263
    %v265 = vpop.xlane.xlu0 %264
    %v266 = vadd.f32 %v262, 0.0
    %v267 = vadd.f32 %v265, 0.0
    %v268 = vmul.f32 %v258, 1.442695
    %v269 = vpow.pop %v268
    %v270 = vmul.f32 %v259, 1.442695
    %v271 = vpow.pop %v270
    %v272 = vmul.f32 %v27, %v269
    %v273 = vmul.f32 %v28, %v271
    %276 = vrot.lane.b32.xlu0 %v250, 126
    %v277 = vpop.permute.xlu0 %276
    %278 = vrot.lane.b32.xlu0 %v253, 126
    %v279 = vpop.permute.xlu0 %278
    %v282 = vadd.f32 %v272, %v277
    %v283 = vadd.f32 %v273, %v279
    %s284 = scalar_lea.vmem [#allocation2], 80
    %v285 = vld [vmem:[%s284] sm:$0xf]
    %v286 = vld [vmem:[%s284 + $0x8] sm:$0xf]
    %v287 = vld [vmem:[%s284 + $0xc] sm:$0xf]
    %v288 = vld [vmem:[%s284 + $0x10] sm:$0xf]
    %v289 = vld [vmem:[%s284 + $0x14] sm:$0xf]
    %v290 = vld [vmem:[%s284 + $0x18] sm:$0xf]
    %v291 = vld [vmem:[%s284 + $0x1c] sm:$0xf]
    %v292 = vld [vmem:[%s284 + $0x20] sm:$0xf]
    %v293 = vld [vmem:[%s284 + $0x24] sm:$0xf]
    %v294 = vld [vmem:[%s284 + $0x28] sm:$0xf]
    %v295 = vld [vmem:[%s284 + $0x2c] sm:$0xf]
    %v296 = vld [vmem:[%s284 + $0x30] sm:$0xf]
    %v297 = vld [vmem:[%s284 + $0x34] sm:$0xf]
    %v298 = vld [vmem:[%s284 + $0x38] sm:$0xf]
    %v299 = vld [vmem:[%s284 + $0x3c] sm:$0xf]
    %v300 = vld [vmem:[%s284 + $0x40] sm:$0xf]
    %v301 = vld [vmem:[%s284 + $0x44] sm:$0xf]
    %v302 = vld [vmem:[%s284 + $0x48] sm:$0xf]
    %v303 = vunpack.c.l.bf16 %v285
    %v304 = vunpack.c.l.bf16 %v302
    %v305 = vsel %vm49, %v282, 1.0
    %v306 = vsel %vm49, %v283, 1.0
    %v307 = vpack.c.bf16 %v306, %v305
    %v309 = vsel %vm53, %v307, 0
    %v312 = vand.u32 %v285, %v60
    %314 = vmatprep.subr.bf16.mxu0 0
    %315 = vmatpush1.bf16.msra.mxu0 0
    %316 = vmatprep.subr.bf16.mxu0 0
    %317 = vmatpush1.bf16.msra.mxu0 0
    %318 = vmatprep.subr.bf16.mxu0 0
    %319 = vmatpush1.bf16.msra.mxu0 0
    %320 = vmatprep.subr.bf16.mxu0 0
    %321 = vmatpush1.bf16.msra.mxu0 0
    %322 = vmatprep.subr.bf16.mxu0 0
    %323 = vmatpush1.bf16.msra.mxu0 0
    %324 = vmatprep.subr.bf16.mxu0 0
    %325 = vmatpush1.bf16.msra.mxu0 0
    %326 = vmatprep.subr.bf16.mxu0 0
    %327 = vmatpush1.bf16.msra.mxu0 0
    %328 = vmatprep.subr.bf16.mxu0 0
    %329 = vmatpush1.bf16.msra.mxu0 %v312
    %330 = vmatprep.subr.bf16.mxu0 0
    %331 = vmatpush2.bf16.msra.mxu0 0
    %332 = vmatprep.subr.bf16.mxu0 0
    %333 = vmatpush2.bf16.msra.mxu0 0
    %334 = vmatprep.subr.bf16.mxu0 0
    %335 = vmatpush2.bf16.msra.mxu0 0
    %336 = vmatprep.subr.bf16.mxu0 0
    %337 = vmatpush2.bf16.msra.mxu0 0
    %338 = vmatprep.subr.bf16.mxu0 0
    %339 = vmatpush2.bf16.msra.mxu0 0
    %340 = vmatprep.subr.bf16.mxu0 0
    %341 = vmatpush2.bf16.msra.mxu0 0
    %342 = vmatprep.subr.bf16.mxu0 0
    %343 = vmatpush2.bf16.msra.mxu0 0
    %344 = vmatprep.subr.bf16.mxu0 0
    %345 = vmatpush2.bf16.msra.mxu0 0
    %346 = vmatprep.mubr.bf16.mxu0 0
    %347 = vmatmul.mubr.bf16.gmra.mxu0 %v309
    %v348 = vpop.f32.mrf.mxu0
    %v349 = vadd.f32 0.0, %v348
    %v350 = vpop.f32.mrf.mxu0
    %v351 = vpop.f32.mrf.mxu0
    %v352 = vadd.f32 0.0, %v351
    %v353 = vpop.f32.mrf.mxu0
    %354 = vdwg.mxu0
    %v355 = vmax.f32 %v349, 0.0
    %v356 = vmax.f32 %v352, 0.0
    %v357 = vpack.c.bf16 %v356, %v355
    %v358 = vlaneseq
    %v359 = vshrl.u32 %v358, 7
    %v360 = vsub.s32 3, %v359
    %v361 = vrot.slane %v303, %v360
    %v370 = vunpack.c.l.b16 %v286
    %v371 = vunpack.c.l.b16 %v287
    %v372 = vunpack.c.l.b16 %v288
    %v373 = vunpack.c.l.b16 %v289
    %v374 = vunpack.c.l.b16 %v290
    %v375 = vunpack.c.l.b16 %v291
    %v376 = vunpack.c.l.b16 %v292
    %v377 = vunpack.c.l.b16 %v293
    %v378 = vpack.c.b16 %v371, %v370
    %v379 = vpack.c.b16 %v373, %v372
    %v380 = vpack.c.b16 %v375, %v374
    %v381 = vpack.c.b16 %v377, %v376
    %v387 = vsel %vm136, %v357, 0
    %389 = vmatprep.subr.bf16.mxu0 0
    %390 = vmatpush1.bf16.msra.mxu0 0
    %391 = vmatprep.subr.bf16.mxu0 0
    %392 = vmatpush1.bf16.msra.mxu0 0
    %393 = vmatprep.subr.bf16.mxu0 0
    %394 = vmatpush1.bf16.msra.mxu0 0
    %395 = vmatprep.subr.bf16.mxu0 0
    %396 = vmatpush1.bf16.msra.mxu0 0
    %397 = vmatprep.subr.bf16.mxu0 0
    %398 = vmatpush1.bf16.msra.mxu0 %v381
    %399 = vmatprep.subr.bf16.mxu0 0
    %400 = vmatpush1.bf16.msra.mxu0 %v380
    %401 = vmatprep.subr.bf16.mxu0 0
    %402 = vmatpush1.bf16.msra.mxu0 %v379
    %403 = vmatprep.subr.bf16.mxu0 0
    %404 = vmatpush1.bf16.msra.mxu0 %v378
    %405 = vmatprep.subr.bf16.mxu0 0
    %406 = vmatpush2.bf16.msra.mxu0 0
    %407 = vmatprep.subr.bf16.mxu0 0
    %408 = vmatpush2.bf16.msra.mxu0 0
    %409 = vmatprep.subr.bf16.mxu0 0
    %410 = vmatpush2.bf16.msra.mxu0 0
    %411 = vmatprep.subr.bf16.mxu0 0
    %412 = vmatpush2.bf16.msra.mxu0 0
    %413 = vmatprep.subr.bf16.mxu0 0
    %414 = vmatpush2.bf16.msra.mxu0 0
    %415 = vmatprep.subr.bf16.mxu0 0
    %416 = vmatpush2.bf16.msra.mxu0 0
    %417 = vmatprep.subr.bf16.mxu0 0
    %418 = vmatpush2.bf16.msra.mxu0 0
    %419 = vmatprep.subr.bf16.mxu0 0
    %420 = vmatpush2.bf16.msra.mxu0 0
    %421 = vmatprep.mubr.bf16.mxu0 0
    %422 = vmatmul.mubr.bf16.gmra.mxu0 %v387
    %v423 = vpop.f32.mrf.mxu0
    %v424 = vadd.f32 %v361, %v423
    %v425 = vpop.f32.mrf.mxu0
    %v426 = vpop.f32.mrf.mxu0
    %v427 = vadd.f32 %v361, %v426
    %v428 = vpop.f32.mrf.mxu0
    %429 = vdwg.mxu0
    %v430 = vmax.f32 %v424, 0.0
    %v431 = vmax.f32 %v427, 0.0
    %v432 = vpack.c.bf16 %v431, %v430
    %v433 = vlaneseq
    %v434 = vshrl.u32 %v433, 7
    %v435 = vsub.s32 0, %v434
    %v436 = vrot.slane %v304, %v435
    %v445 = vunpack.c.l.b16 %v294
    %v446 = vunpack.c.l.b16 %v295
    %v447 = vunpack.c.l.b16 %v296
    %v448 = vunpack.c.l.b16 %v297
    %v449 = vunpack.c.l.b16 %v298
    %v450 = vunpack.c.l.b16 %v299
    %v451 = vunpack.c.l.b16 %v300
    %v452 = vunpack.c.l.b16 %v301
    %v453 = vpack.c.b16 %v446, %v445
    %v454 = vpack.c.b16 %v448, %v447
    %v455 = vpack.c.b16 %v450, %v449
    %v456 = vpack.c.b16 %v452, %v451
    %v462 = vsel %vm136, %v432, 0
    %464 = vmatprep.subr.bf16.mxu0 0
    %465 = vmatpush1.bf16.msra.mxu0 0
    %466 = vmatprep.subr.bf16.mxu0 0
    %467 = vmatpush1.bf16.msra.mxu0 0
    %468 = vmatprep.subr.bf16.mxu0 0
    %469 = vmatpush1.bf16.msra.mxu0 0
    %470 = vmatprep.subr.bf16.mxu0 0
    %471 = vmatpush1.bf16.msra.mxu0 0
    %472 = vmatprep.subr.bf16.mxu0 0
    %473 = vmatpush1.bf16.msra.mxu0 %v456
    %474 = vmatprep.subr.bf16.mxu0 0
    %475 = vmatpush1.bf16.msra.mxu0 %v455
    %476 = vmatprep.subr.bf16.mxu0 0
    %477 = vmatpush1.bf16.msra.mxu0 %v454
    %478 = vmatprep.subr.bf16.mxu0 0
    %479 = vmatpush1.bf16.msra.mxu0 %v453
    %480 = vmatprep.subr.bf16.mxu0 0
    %481 = vmatpush2.bf16.msra.mxu0 0
    %482 = vmatprep.subr.bf16.mxu0 0
    %483 = vmatpush2.bf16.msra.mxu0 0
    %484 = vmatprep.subr.bf16.mxu0 0
    %485 = vmatpush2.bf16.msra.mxu0 0
    %486 = vmatprep.subr.bf16.mxu0 0
    %487 = vmatpush2.bf16.msra.mxu0 0
    %488 = vmatprep.subr.bf16.mxu0 0
    %489 = vmatpush2.bf16.msra.mxu0 0
    %490 = vmatprep.subr.bf16.mxu0 0
    %491 = vmatpush2.bf16.msra.mxu0 0
    %492 = vmatprep.subr.bf16.mxu0 0
    %493 = vmatpush2.bf16.msra.mxu0 0
    %494 = vmatprep.subr.bf16.mxu0 0
    %495 = vmatpush2.bf16.msra.mxu0 0
    %496 = vmatprep.mubr.bf16.mxu0 0
    %497 = vmatmul.mubr.bf16.gmra.mxu0 %v462
    %v498 = vpop.f32.mrf.mxu0
    %v499 = vadd.f32 %v436, %v498
    %v500 = vpop.f32.mrf.mxu0
    %v501 = vpop.f32.mrf.mxu0
    %v502 = vadd.f32 %v436, %v501
    %v503 = vpop.f32.mrf.mxu0
    %504 = vdwg.mxu0
    %v505 = vmax.f32 %v499, -5.0
    %v506 = vmax.f32 %v502, -5.0
    %v507 = vmin.f32 %v505, 5.0
    %v508 = vmin.f32 %v506, 5.0
    %v509 = vsel %vm49, %v507, 0.0
    %510 = vadd.xlane.f32.xlu0 %v509
    %v511 = vpop.xlane.xlu0 %510
    %v512 = vsel %vm49, %v508, 0.0
    %513 = vadd.xlane.f32.xlu0 %v512
    %v514 = vpop.xlane.xlu0 %513
    %v515 = vadd.f32 %v266, %v511
    %v516 = vadd.f32 %v267, %v514
    %v517 = vmul.f32 %v507, 1.442695
    %v518 = vpow.pop %v517
    %v519 = vmul.f32 %v508, 1.442695
    %v520 = vpow.pop %v519
    %v521 = vmul.f32 %v282, %v518
    %v522 = vmul.f32 %v283, %v520
    %525 = vrot.lane.b32.xlu0 %v499, 126
    %v526 = vpop.permute.xlu0 %525
    %527 = vrot.lane.b32.xlu0 %v502, 126
    %v528 = vpop.permute.xlu0 %527
    %v531 = vadd.f32 %v521, %v526
    %v532 = vadd.f32 %v522, %v528
    %s533 = scalar_lea.vmem [#allocation2], 160
    %v534 = vld [vmem:[%s533] sm:$0xf]
    %v535 = vld [vmem:[%s533 + $0x8] sm:$0xf]
    %v536 = vld [vmem:[%s533 + $0xc] sm:$0xf]
    %v537 = vld [vmem:[%s533 + $0x10] sm:$0xf]
    %v538 = vld [vmem:[%s533 + $0x14] sm:$0xf]
    %v539 = vld [vmem:[%s533 + $0x18] sm:$0xf]
    %v540 = vld [vmem:[%s533 + $0x1c] sm:$0xf]
    %v541 = vld [vmem:[%s533 + $0x20] sm:$0xf]
    %v542 = vld [vmem:[%s533 + $0x24] sm:$0xf]
    %v543 = vld [vmem:[%s533 + $0x28] sm:$0xf]
    %v544 = vld [vmem:[%s533 + $0x2c] sm:$0xf]
    %v545 = vld [vmem:[%s533 + $0x30] sm:$0xf]
    %v546 = vld [vmem:[%s533 + $0x34] sm:$0xf]
    %v547 = vld [vmem:[%s533 + $0x38] sm:$0xf]
    %v548 = vld [vmem:[%s533 + $0x3c] sm:$0xf]
    %v549 = vld [vmem:[%s533 + $0x40] sm:$0xf]
    %v550 = vld [vmem:[%s533 + $0x44] sm:$0xf]
    %v551 = vld [vmem:[%s533 + $0x48] sm:$0xf]
    %v552 = vunpack.c.l.bf16 %v534
    %v553 = vunpack.c.l.bf16 %v551
    %v554 = vsel %vm49, %v531, 1.0
    %v555 = vsel %vm49, %v532, 1.0
    %v556 = vpack.c.bf16 %v555, %v554
    %v558 = vsel %vm53, %v556, 0
    %v561 = vand.u32 %v534, %v60
    %563 = vmatprep.subr.bf16.mxu0 0
    %564 = vmatpush1.bf16.msra.mxu0 0
    %565 = vmatprep.subr.bf16.mxu0 0
    %566 = vmatpush1.bf16.msra.mxu0 0
    %567 = vmatprep.subr.bf16.mxu0 0
    %568 = vmatpush1.bf16.msra.mxu0 0
    %569 = vmatprep.subr.bf16.mxu0 0
    %570 = vmatpush1.bf16.msra.mxu0 0
    %571 = vmatprep.subr.bf16.mxu0 0
    %572 = vmatpush1.bf16.msra.mxu0 0
    %573 = vmatprep.subr.bf16.mxu0 0
    %574 = vmatpush1.bf16.msra.mxu0 0
    %575 = vmatprep.subr.bf16.mxu0 0
    %576 = vmatpush1.bf16.msra.mxu0 0
    %577 = vmatprep.subr.bf16.mxu0 0
    %578 = vmatpush1.bf16.msra.mxu0 %v561
    %579 = vmatprep.subr.bf16.mxu0 0
    %580 = vmatpush2.bf16.msra.mxu0 0
    %581 = vmatprep.subr.bf16.mxu0 0
    %582 = vmatpush2.bf16.msra.mxu0 0
    %583 = vmatprep.subr.bf16.mxu0 0
    %584 = vmatpush2.bf16.msra.mxu0 0
    %585 = vmatprep.subr.bf16.mxu0 0
    %586 = vmatpush2.bf16.msra.mxu0 0
    %587 = vmatprep.subr.bf16.mxu0 0
    %588 = vmatpush2.bf16.msra.mxu0 0
    %589 = vmatprep.subr.bf16.mxu0 0
    %590 = vmatpush2.bf16.msra.mxu0 0
    %591 = vmatprep.subr.bf16.mxu0 0
    %592 = vmatpush2.bf16.msra.mxu0 0
    %593 = vmatprep.subr.bf16.mxu0 0
    %594 = vmatpush2.bf16.msra.mxu0 0
    %595 = vmatprep.mubr.bf16.mxu0 0
    %596 = vmatmul.mubr.bf16.gmra.mxu0 %v558
    %v597 = vpop.f32.mrf.mxu0
    %v598 = vadd.f32 0.0, %v597
    %v599 = vpop.f32.mrf.mxu0
    %v600 = vpop.f32.mrf.mxu0
    %v601 = vadd.f32 0.0, %v600
    %v602 = vpop.f32.mrf.mxu0
    %603 = vdwg.mxu0
    %v604 = vmax.f32 %v598, 0.0
    %v605 = vmax.f32 %v601, 0.0
    %v606 = vpack.c.bf16 %v605, %v604
    %v607 = vlaneseq
    %v608 = vshrl.u32 %v607, 7
    %v609 = vsub.s32 3, %v608
    %v610 = vrot.slane %v552, %v609
    %v619 = vunpack.c.l.b16 %v535
    %v620 = vunpack.c.l.b16 %v536
    %v621 = vunpack.c.l.b16 %v537
    %v622 = vunpack.c.l.b16 %v538
    %v623 = vunpack.c.l.b16 %v539
    %v624 = vunpack.c.l.b16 %v540
    %v625 = vunpack.c.l.b16 %v541
    %v626 = vunpack.c.l.b16 %v542
    %v627 = vpack.c.b16 %v620, %v619
    %v628 = vpack.c.b16 %v622, %v621
    %v629 = vpack.c.b16 %v624, %v623
    %v630 = vpack.c.b16 %v626, %v625
    %v636 = vsel %vm136, %v606, 0
    %638 = vmatprep.subr.bf16.mxu0 0
    %639 = vmatpush1.bf16.msra.mxu0 0
    %640 = vmatprep.subr.bf16.mxu0 0
    %641 = vmatpush1.bf16.msra.mxu0 0
    %642 = vmatprep.subr.bf16.mxu0 0
    %643 = vmatpush1.bf16.msra.mxu0 0
    %644 = vmatprep.subr.bf16.mxu0 0
    %645 = vmatpush1.bf16.msra.mxu0 0
    %646 = vmatprep.subr.bf16.mxu0 0
    %647 = vmatpush1.bf16.msra.mxu0 %v630
    %648 = vmatprep.subr.bf16.mxu0 0
    %649 = vmatpush1.bf16.msra.mxu0 %v629
    %650 = vmatprep.subr.bf16.mxu0 0
    %651 = vmatpush1.bf16.msra.mxu0 %v628
    %652 = vmatprep.subr.bf16.mxu0 0
    %653 = vmatpush1.bf16.msra.mxu0 %v627
    %654 = vmatprep.subr.bf16.mxu0 0
    %655 = vmatpush2.bf16.msra.mxu0 0
    %656 = vmatprep.subr.bf16.mxu0 0
    %657 = vmatpush2.bf16.msra.mxu0 0
    %658 = vmatprep.subr.bf16.mxu0 0
    %659 = vmatpush2.bf16.msra.mxu0 0
    %660 = vmatprep.subr.bf16.mxu0 0
    %661 = vmatpush2.bf16.msra.mxu0 0
    %662 = vmatprep.subr.bf16.mxu0 0
    %663 = vmatpush2.bf16.msra.mxu0 0
    %664 = vmatprep.subr.bf16.mxu0 0
    %665 = vmatpush2.bf16.msra.mxu0 0
    %666 = vmatprep.subr.bf16.mxu0 0
    %667 = vmatpush2.bf16.msra.mxu0 0
    %668 = vmatprep.subr.bf16.mxu0 0
    %669 = vmatpush2.bf16.msra.mxu0 0
    %670 = vmatprep.mubr.bf16.mxu0 0
    %671 = vmatmul.mubr.bf16.gmra.mxu0 %v636
    %v672 = vpop.f32.mrf.mxu0
    %v673 = vadd.f32 %v610, %v672
    %v674 = vpop.f32.mrf.mxu0
    %v675 = vpop.f32.mrf.mxu0
    %v676 = vadd.f32 %v610, %v675
    %v677 = vpop.f32.mrf.mxu0
    %678 = vdwg.mxu0
    %v679 = vmax.f32 %v673, 0.0
    %v680 = vmax.f32 %v676, 0.0
    %v681 = vpack.c.bf16 %v680, %v679
    %v682 = vlaneseq
    %v683 = vshrl.u32 %v682, 7
    %v684 = vsub.s32 0, %v683
    %v685 = vrot.slane %v553, %v684
    %v694 = vunpack.c.l.b16 %v543
    %v695 = vunpack.c.l.b16 %v544
    %v696 = vunpack.c.l.b16 %v545
    %v697 = vunpack.c.l.b16 %v546
    %v698 = vunpack.c.l.b16 %v547
    %v699 = vunpack.c.l.b16 %v548
    %v700 = vunpack.c.l.b16 %v549
    %v701 = vunpack.c.l.b16 %v550
    %v702 = vpack.c.b16 %v695, %v694
    %v703 = vpack.c.b16 %v697, %v696
    %v704 = vpack.c.b16 %v699, %v698
    %v705 = vpack.c.b16 %v701, %v700
    %v711 = vsel %vm136, %v681, 0
    %713 = vmatprep.subr.bf16.mxu0 0
    %714 = vmatpush1.bf16.msra.mxu0 0
    %715 = vmatprep.subr.bf16.mxu0 0
    %716 = vmatpush1.bf16.msra.mxu0 0
    %717 = vmatprep.subr.bf16.mxu0 0
    %718 = vmatpush1.bf16.msra.mxu0 0
    %719 = vmatprep.subr.bf16.mxu0 0
    %720 = vmatpush1.bf16.msra.mxu0 0
    %721 = vmatprep.subr.bf16.mxu0 0
    %722 = vmatpush1.bf16.msra.mxu0 %v705
    %723 = vmatprep.subr.bf16.mxu0 0
    %724 = vmatpush1.bf16.msra.mxu0 %v704
    %725 = vmatprep.subr.bf16.mxu0 0
    %726 = vmatpush1.bf16.msra.mxu0 %v703
    %727 = vmatprep.subr.bf16.mxu0 0
    %728 = vmatpush1.bf16.msra.mxu0 %v702
    %729 = vmatprep.subr.bf16.mxu0 0
    %730 = vmatpush2.bf16.msra.mxu0 0
    %731 = vmatprep.subr.bf16.mxu0 0
    %732 = vmatpush2.bf16.msra.mxu0 0
    %733 = vmatprep.subr.bf16.mxu0 0
    %734 = vmatpush2.bf16.msra.mxu0 0
    %735 = vmatprep.subr.bf16.mxu0 0
    %736 = vmatpush2.bf16.msra.mxu0 0
    %737 = vmatprep.subr.bf16.mxu0 0
    %738 = vmatpush2.bf16.msra.mxu0 0
    %739 = vmatprep.subr.bf16.mxu0 0
    %740 = vmatpush2.bf16.msra.mxu0 0
    %741 = vmatprep.subr.bf16.mxu0 0
    %742 = vmatpush2.bf16.msra.mxu0 0
    %743 = vmatprep.subr.bf16.mxu0 0
    %744 = vmatpush2.bf16.msra.mxu0 0
    %745 = vmatprep.mubr.bf16.mxu0 0
    %746 = vmatmul.mubr.bf16.gmra.mxu0 %v711
    %v747 = vpop.f32.mrf.mxu0
    %v748 = vadd.f32 %v685, %v747
    %v749 = vpop.f32.mrf.mxu0
    %v750 = vpop.f32.mrf.mxu0
    %v751 = vadd.f32 %v685, %v750
    %v752 = vpop.f32.mrf.mxu0
    %753 = vdwg.mxu0
    %v754 = vmax.f32 %v748, -5.0
    %v755 = vmax.f32 %v751, -5.0
    %v756 = vmin.f32 %v754, 5.0
    %v757 = vmin.f32 %v755, 5.0
    %v758 = vsel %vm49, %v756, 0.0
    %759 = vadd.xlane.f32.xlu0 %v758
    %v760 = vpop.xlane.xlu0 %759
    %v761 = vsel %vm49, %v757, 0.0
    %762 = vadd.xlane.f32.xlu0 %v761
    %v763 = vpop.xlane.xlu0 %762
    %v764 = vadd.f32 %v515, %v760
    %v765 = vadd.f32 %v516, %v763
    %v766 = vmul.f32 %v756, 1.442695
    %v767 = vpow.pop %v766
    %v768 = vmul.f32 %v757, 1.442695
    %v769 = vpow.pop %v768
    %v770 = vmul.f32 %v531, %v767
    %v771 = vmul.f32 %v532, %v769
    %774 = vrot.lane.b32.xlu0 %v748, 126
    %v775 = vpop.permute.xlu0 %774
    %776 = vrot.lane.b32.xlu0 %v751, 126
    %v777 = vpop.permute.xlu0 %776
    %v780 = vadd.f32 %v770, %v775
    %v781 = vadd.f32 %v771, %v777
    %s782 = scalar_lea.vmem [#allocation2], 240
    %v783 = vld [vmem:[%s782] sm:$0xf]
    %v784 = vld [vmem:[%s782 + $0x8] sm:$0xf]
    %v785 = vld [vmem:[%s782 + $0xc] sm:$0xf]
    %v786 = vld [vmem:[%s782 + $0x10] sm:$0xf]
    %v787 = vld [vmem:[%s782 + $0x14] sm:$0xf]
    %v788 = vld [vmem:[%s782 + $0x18] sm:$0xf]
    %v789 = vld [vmem:[%s782 + $0x1c] sm:$0xf]
    %v790 = vld [vmem:[%s782 + $0x20] sm:$0xf]
    %v791 = vld [vmem:[%s782 + $0x24] sm:$0xf]
    %v792 = vld [vmem:[%s782 + $0x28] sm:$0xf]
    %v793 = vld [vmem:[%s782 + $0x2c] sm:$0xf]
    %v794 = vld [vmem:[%s782 + $0x30] sm:$0xf]
    %v795 = vld [vmem:[%s782 + $0x34] sm:$0xf]
    %v796 = vld [vmem:[%s782 + $0x38] sm:$0xf]
    %v797 = vld [vmem:[%s782 + $0x3c] sm:$0xf]
    %v798 = vld [vmem:[%s782 + $0x40] sm:$0xf]
    %v799 = vld [vmem:[%s782 + $0x44] sm:$0xf]
    %v800 = vld [vmem:[%s782 + $0x48] sm:$0xf]
    %v801 = vunpack.c.l.bf16 %v783
    %v802 = vunpack.c.l.bf16 %v800
    %v803 = vsel %vm49, %v780, 1.0
    %v804 = vsel %vm49, %v781, 1.0
    %v805 = vpack.c.bf16 %v804, %v803
    %v807 = vsel %vm53, %v805, 0
    %v810 = vand.u32 %v783, %v60
    %812 = vmatprep.subr.bf16.mxu0 0
    %813 = vmatpush1.bf16.msra.mxu0 0
    %814 = vmatprep.subr.bf16.mxu0 0
    %815 = vmatpush1.bf16.msra.mxu0 0
    %816 = vmatprep.subr.bf16.mxu0 0
    %817 = vmatpush1.bf16.msra.mxu0 0
    %818 = vmatprep.subr.bf16.mxu0 0
    %819 = vmatpush1.bf16.msra.mxu0 0
    %820 = vmatprep.subr.bf16.mxu0 0
    %821 = vmatpush1.bf16.msra.mxu0 0
    %822 = vmatprep.subr.bf16.mxu0 0
    %823 = vmatpush1.bf16.msra.mxu0 0
    %824 = vmatprep.subr.bf16.mxu0 0
    %825 = vmatpush1.bf16.msra.mxu0 0
    %826 = vmatprep.subr.bf16.mxu0 0
    %827 = vmatpush1.bf16.msra.mxu0 %v810
    %828 = vmatprep.subr.bf16.mxu0 0
    %829 = vmatpush2.bf16.msra.mxu0 0
    %830 = vmatprep.subr.bf16.mxu0 0
    %831 = vmatpush2.bf16.msra.mxu0 0
    %832 = vmatprep.subr.bf16.mxu0 0
    %833 = vmatpush2.bf16.msra.mxu0 0
    %834 = vmatprep.subr.bf16.mxu0 0
    %835 = vmatpush2.bf16.msra.mxu0 0
    %836 = vmatprep.subr.bf16.mxu0 0
    %837 = vmatpush2.bf16.msra.mxu0 0
    %838 = vmatprep.subr.bf16.mxu0 0
    %839 = vmatpush2.bf16.msra.mxu0 0
    %840 = vmatprep.subr.bf16.mxu0 0
    %841 = vmatpush2.bf16.msra.mxu0 0
    %842 = vmatprep.subr.bf16.mxu0 0
    %843 = vmatpush2.bf16.msra.mxu0 0
    %844 = vmatprep.mubr.bf16.mxu0 0
    %845 = vmatmul.mubr.bf16.gmra.mxu0 %v807
    %v846 = vpop.f32.mrf.mxu0
    %v847 = vadd.f32 0.0, %v846
    %v848 = vpop.f32.mrf.mxu0
    %v849 = vpop.f32.mrf.mxu0
    %v850 = vadd.f32 0.0, %v849
    %v851 = vpop.f32.mrf.mxu0
    %852 = vdwg.mxu0
    %v853 = vmax.f32 %v847, 0.0
    %v854 = vmax.f32 %v850, 0.0
    %v855 = vpack.c.bf16 %v854, %v853
    %v856 = vlaneseq
    %v857 = vshrl.u32 %v856, 7
    %v858 = vsub.s32 3, %v857
    %v859 = vrot.slane %v801, %v858
    %v868 = vunpack.c.l.b16 %v784
    %v869 = vunpack.c.l.b16 %v785
    %v870 = vunpack.c.l.b16 %v786
    %v871 = vunpack.c.l.b16 %v787
    %v872 = vunpack.c.l.b16 %v788
    %v873 = vunpack.c.l.b16 %v789
    %v874 = vunpack.c.l.b16 %v790
    %v875 = vunpack.c.l.b16 %v791
    %v876 = vpack.c.b16 %v869, %v868
    %v877 = vpack.c.b16 %v871, %v870
    %v878 = vpack.c.b16 %v873, %v872
    %v879 = vpack.c.b16 %v875, %v874
    %v885 = vsel %vm136, %v855, 0
    %887 = vmatprep.subr.bf16.mxu0 0
    %888 = vmatpush1.bf16.msra.mxu0 0
    %889 = vmatprep.subr.bf16.mxu0 0
    %890 = vmatpush1.bf16.msra.mxu0 0
    %891 = vmatprep.subr.bf16.mxu0 0
    %892 = vmatpush1.bf16.msra.mxu0 0
    %893 = vmatprep.subr.bf16.mxu0 0
    %894 = vmatpush1.bf16.msra.mxu0 0
    %895 = vmatprep.subr.bf16.mxu0 0
    %896 = vmatpush1.bf16.msra.mxu0 %v879
    %897 = vmatprep.subr.bf16.mxu0 0
    %898 = vmatpush1.bf16.msra.mxu0 %v878
    %899 = vmatprep.subr.bf16.mxu0 0
    %900 = vmatpush1.bf16.msra.mxu0 %v877
    %901 = vmatprep.subr.bf16.mxu0 0
    %902 = vmatpush1.bf16.msra.mxu0 %v876
    %903 = vmatprep.subr.bf16.mxu0 0
    %904 = vmatpush2.bf16.msra.mxu0 0
    %905 = vmatprep.subr.bf16.mxu0 0
    %906 = vmatpush2.bf16.msra.mxu0 0
    %907 = vmatprep.subr.bf16.mxu0 0
    %908 = vmatpush2.bf16.msra.mxu0 0
    %909 = vmatprep.subr.bf16.mxu0 0
    %910 = vmatpush2.bf16.msra.mxu0 0
    %911 = vmatprep.subr.bf16.mxu0 0
    %912 = vmatpush2.bf16.msra.mxu0 0
    %913 = vmatprep.subr.bf16.mxu0 0
    %914 = vmatpush2.bf16.msra.mxu0 0
    %915 = vmatprep.subr.bf16.mxu0 0
    %916 = vmatpush2.bf16.msra.mxu0 0
    %917 = vmatprep.subr.bf16.mxu0 0
    %918 = vmatpush2.bf16.msra.mxu0 0
    %919 = vmatprep.mubr.bf16.mxu0 0
    %920 = vmatmul.mubr.bf16.gmra.mxu0 %v885
    %v921 = vpop.f32.mrf.mxu0
    %v922 = vadd.f32 %v859, %v921
    %v923 = vpop.f32.mrf.mxu0
    %v924 = vpop.f32.mrf.mxu0
    %v925 = vadd.f32 %v859, %v924
    %v926 = vpop.f32.mrf.mxu0
    %927 = vdwg.mxu0
    %v928 = vmax.f32 %v922, 0.0
    %v929 = vmax.f32 %v925, 0.0
    %v930 = vpack.c.bf16 %v929, %v928
    %v931 = vlaneseq
    %v932 = vshrl.u32 %v931, 7
    %v933 = vsub.s32 0, %v932
    %v934 = vrot.slane %v802, %v933
    %v943 = vunpack.c.l.b16 %v792
    %v944 = vunpack.c.l.b16 %v793
    %v945 = vunpack.c.l.b16 %v794
    %v946 = vunpack.c.l.b16 %v795
    %v947 = vunpack.c.l.b16 %v796
    %v948 = vunpack.c.l.b16 %v797
    %v949 = vunpack.c.l.b16 %v798
    %v950 = vunpack.c.l.b16 %v799
    %v951 = vpack.c.b16 %v944, %v943
    %v952 = vpack.c.b16 %v946, %v945
    %v953 = vpack.c.b16 %v948, %v947
    %v954 = vpack.c.b16 %v950, %v949
    %v960 = vsel %vm136, %v930, 0
    %962 = vmatprep.subr.bf16.mxu0 0
    %963 = vmatpush1.bf16.msra.mxu0 0
    %964 = vmatprep.subr.bf16.mxu0 0
    %965 = vmatpush1.bf16.msra.mxu0 0
    %966 = vmatprep.subr.bf16.mxu0 0
    %967 = vmatpush1.bf16.msra.mxu0 0
    %968 = vmatprep.subr.bf16.mxu0 0
    %969 = vmatpush1.bf16.msra.mxu0 0
    %970 = vmatprep.subr.bf16.mxu0 0
    %971 = vmatpush1.bf16.msra.mxu0 %v954
    %972 = vmatprep.subr.bf16.mxu0 0
    %973 = vmatpush1.bf16.msra.mxu0 %v953
    %974 = vmatprep.subr.bf16.mxu0 0
    %975 = vmatpush1.bf16.msra.mxu0 %v952
    %976 = vmatprep.subr.bf16.mxu0 0
    %977 = vmatpush1.bf16.msra.mxu0 %v951
    %978 = vmatprep.subr.bf16.mxu0 0
    %979 = vmatpush2.bf16.msra.mxu0 0
    %980 = vmatprep.subr.bf16.mxu0 0
    %981 = vmatpush2.bf16.msra.mxu0 0
    %982 = vmatprep.subr.bf16.mxu0 0
    %983 = vmatpush2.bf16.msra.mxu0 0
    %984 = vmatprep.subr.bf16.mxu0 0
    %985 = vmatpush2.bf16.msra.mxu0 0
    %986 = vmatprep.subr.bf16.mxu0 0
    %987 = vmatpush2.bf16.msra.mxu0 0
    %988 = vmatprep.subr.bf16.mxu0 0
    %989 = vmatpush2.bf16.msra.mxu0 0
    %990 = vmatprep.subr.bf16.mxu0 0
    %991 = vmatpush2.bf16.msra.mxu0 0
    %992 = vmatprep.subr.bf16.mxu0 0
    %993 = vmatpush2.bf16.msra.mxu0 0
    %994 = vmatprep.mubr.bf16.mxu0 0
    %995 = vmatmul.mubr.bf16.gmra.mxu0 %v960
    %v996 = vpop.f32.mrf.mxu0
    %v997 = vadd.f32 %v934, %v996
    %v998 = vpop.f32.mrf.mxu0
    %v999 = vpop.f32.mrf.mxu0
    %v1000 = vadd.f32 %v934, %v999
    %v1001 = vpop.f32.mrf.mxu0
    %1002 = vdwg.mxu0
    %v1003 = vmax.f32 %v997, -5.0
    %v1004 = vmax.f32 %v1000, -5.0
    %v1005 = vmin.f32 %v1003, 5.0
    %v1006 = vmin.f32 %v1004, 5.0
    %v1007 = vsel %vm49, %v1005, 0.0
    %1008 = vadd.xlane.f32.xlu0 %v1007
    %v1009 = vpop.xlane.xlu0 %1008
    %v1010 = vsel %vm49, %v1006, 0.0
    %1011 = vadd.xlane.f32.xlu0 %v1010
    %v1012 = vpop.xlane.xlu0 %1011
    %v1013 = vadd.f32 %v764, %v1009
    %v1014 = vadd.f32 %v765, %v1012
    %v1015 = vmul.f32 %v1005, 1.442695
    %v1016 = vpow.pop %v1015
    %v1017 = vmul.f32 %v1006, 1.442695
    %v1018 = vpow.pop %v1017
    %v1019 = vmul.f32 %v780, %v1016
    %v1020 = vmul.f32 %v781, %v1018
    %1023 = vrot.lane.b32.xlu0 %v997, 126
    %v1024 = vpop.permute.xlu0 %1023
    %1025 = vrot.lane.b32.xlu0 %v1000, 126
    %v1026 = vpop.permute.xlu0 %1025
    %v1029 = vadd.f32 %v1019, %v1024
    %v1030 = vadd.f32 %v1020, %v1026
    %v1031 = vsel %vm49, %v1029, %v1013
    %v1032 = vsel %vm49, %v1030, %v1014
    %v1033 = vsel %vm53, %v1031, 0.0
    %v1034 = vsel %vm53, %v1032, 0.0
    %1035 = vst [vmem:[#allocation5] sm:$0xff] %v1033
    %1036 = vst [vmem:[#allocation5 + $0x8] sm:$0xff] %v1034
    // Predicated region
    $region14: #{tpu_custom_call.1} parent=1 // pred_check
      _
    $region15: #{tpu_custom_call.1} parent=1 // pred_check_branch
      %1038 = sbr.rel (0) target = $region17
    $region16: #{tpu_custom_call.1} parent=1 // pred_region
      %s1040 = ssub.s32 256, 256
      %1041 = vsyncadd [#allocation4], %s1040
      %s1042 = sshll.u32 [#allocation5], 4
      %s1043 = int_to_ptr.vmem [resolvable:$true] %s1042
      %1048 = dma.vmem_to_hbm [thread:$0]  %s1043, 256, %s2, [#allocation4], 128, 128, 8
    $region17: #{tpu_custom_call.1} parent=1 // pred_fallthru
      _
    // Predicated region
    $region18: #{tpu_custom_call.1} parent=1 // pred_check
      _
    $region19: #{tpu_custom_call.1} parent=1 // pred_check_branch
      %1050 = sbr.rel (0) target = $region21
    $region20: #{tpu_custom_call.1} parent=1 // pred_region
      %1051 = dma.done [#allocation4], 256
    $region21: #{tpu_custom_call.1} parent=1 // pred_fallthru
      _
    %1052 = vsyncpa [#allocation3], 1
    %1053 = vsyncpa [#allocation4], 1

</llo_original>
